<compile_context>
chip_gen: v6e
topology: v6e:2x2x1
jax: 0.10.0
libtpu: 0.0.40
codegen_flags: <defaults>
</compile_context>

<pallas_src>
import math
import jax
import jax.numpy as jnp
from jax.experimental import pallas as pl
from jax.experimental.pallas import tpu as pltpu

# ----------------------- model hyperparameters (small, deterministic) -----------------------
BATCH = 8
INPUT_CHANNELS = 64          # C
FEATUREDIM = 32              # fc1 output dim
N_CONV = 20                  # Conv1d out channels (fixed in the module)

KERNEL_SIZE = math.ceil(INPUT_CHANNELS / 9)          # = 8
POOL_SIZE = math.ceil(KERNEL_SIZE / 5)               # = 2
L_CONV = INPUT_CHANNELS - KERNEL_SIZE + 1            # conv output length = 57
LP = (L_CONV - POOL_SIZE) // POOL_SIZE + 1           # MaxPool1d output length = 28
FEATURES_SIZE = N_CONV * LP                          # = 560 (matches _get_final_flattened_size)
FS_PAD = ((FEATURES_SIZE + 127) // 128) * 128        # = 640, lane-tile aligned


# ----------------------------------- Pallas kernel -----------------------------------
def _embedding_kernel(x_ref,      # VMEM (B, C)            f32
                      wc_ref,     # VMEM (C, 2*FS_PAD)     f32  fused Toeplitz conv weight
                      cb_ref,     # VMEM (1, FS_PAD)       f32  conv bias (repeated, zero-padded)
                      fcw_ref,    # VMEM (FS_PAD, F)       f32  fc_w.T, zero-padded rows
                      fcb_ref,    # VMEM (1, F)            f32
                      out_ref):   # VMEM (B, F)            f32
    # Conv at both pool offsets in ONE MXU matmul: (B, 64) @ (64, 1280).
    conv_all = jnp.dot(x_ref[...], wc_ref[...],
                       preferred_element_type=jnp.float32)          # (B, 2*FS_PAD)

    # 640 is a multiple of 128 -> tile-aligned slices, no relayout.
    c0 = conv_all[:, :FS_PAD]
    c1 = conv_all[:, FS_PAD:]

    # Max-pool over the two offsets; bias after max == PyTorch bias-before-pool
    # (bias is constant per channel; padded lanes stay exactly 0).
    pooled = jnp.maximum(c0, c1) + cb_ref[...]                       # (B, FS_PAD)

    # Single fused FC matmul on the MXU: (B, 640) @ (640, 32); padded rows are zero.
    out_ref[...] = (jnp.dot(pooled, fcw_ref[...],
                            preferred_element_type=jnp.float32)
                    + fcb_ref[...])


# ----------------------------------- one-time param prep -----------------------------------
def prepare_params(conv_w, conv_b, fc_w, fc_b):
    """Call ONCE at init.  Builds the Toeplitz conv matrix and padded FC weights."""
    conv_w = conv_w.astype(jnp.float32)
    conv_b = conv_b.astype(jnp.float32)
    fc_w = fc_w.astype(jnp.float32)
    fc_b = fc_b.astype(jnp.float32)

    # M[j, c, o*LP + p] = conv_w[o, k] with k = c - POOL*p - j, zero when k outside [0, K).
    j = jnp.arange(POOL_SIZE)[:, None, None, None]                    # (J,1,1,1)
    c = jnp.arange(INPUT_CHANNELS)[None, :, None, None]               # (1,C,1,1)
    o = jnp.arange(N_CONV)[None, None, :, None]                       # (1,1,O,1)
    p = jnp.arange(LP)[None, None, None, :]                           # (1,1,1,LP)
    k = c - POOL_SIZE * p - j                                         # (J,C,1,LP)
    valid = (k >= 0) & (k < KERNEL_SIZE)
    kc = jnp.clip(k, 0, KERNEL_SIZE - 1)
    vals = conv_w[o, kc]                                              # (J,C,O,LP)
    M = jnp.where(valid, vals, 0.0).reshape(POOL_SIZE, INPUT_CHANNELS, FEATURES_SIZE)

    # Pad each pool offset's feature axis to FS_PAD and fuse into one (C, 2*FS_PAD) weight.
    M_pad = jnp.pad(M, ((0, 0), (0, 0), (0, FS_PAD - FEATURES_SIZE)))  # (J, C, FS_PAD)
    wc = jnp.concatenate([M_pad[0], M_pad[1]], axis=1)                 # (C, 2*FS_PAD)

    cb = jnp.repeat(conv_b, LP)                                        # (560,)
    cb_pad = jnp.pad(cb, (0, FS_PAD - FEATURES_SIZE)).reshape(1, FS_PAD)

    fcw_pad = jnp.pad(fc_w.T, ((0, FS_PAD - FEATURES_SIZE), (0, 0)))   # (FS_PAD, F)
    fcb2 = fc_b.reshape(1, FEATUREDIM)

    return wc, cb_pad, fcw_pad, fcb2


# ----------------------------------- per-call wrapper -----------------------------------
def embedding_net_forward(x, params):
    """x: (B, C, 1, 1) float32, params: output of prepare_params -> (B, FEATUREDIM) f32."""
    wc, cb_pad, fcw_pad, fcb2 = params
    B = x.shape[0]
    # x.squeeze(-1).squeeze(-1) -> (B, C); the .unsqueeze(1) is absorbed in the Toeplitz layout.
    x2 = x.reshape(B, INPUT_CHANNELS).astype(jnp.float32)

    cost = pl.CostEstimate(
        flops=2 * B * INPUT_CHANNELS * (2 * FS_PAD) + 2 * B * FS_PAD * FEATUREDIM,
        transcendentals=0,
        bytes_accessed=4 * (B * INPUT_CHANNELS
                            + INPUT_CHANNELS * 2 * FS_PAD
                            + FS_PAD
                            + FS_PAD * FEATUREDIM
                            + FEATUREDIM
                            + B * FEATUREDIM),
    )

    return pl.pallas_call(
        _embedding_kernel,
        out_shape=jax.ShapeDtypeStruct((B, FEATUREDIM), jnp.float32),
        in_specs=[
            pl.BlockSpec(memory_space=pltpu.MemorySpace.VMEM),   # x2
            pl.BlockSpec(memory_space=pltpu.MemorySpace.VMEM),   # fused Toeplitz conv weight
            pl.BlockSpec(memory_space=pltpu.MemorySpace.VMEM),   # conv bias (padded)
            pl.BlockSpec(memory_space=pltpu.MemorySpace.VMEM),   # fc weight (fc_w.T, padded)
            pl.BlockSpec(memory_space=pltpu.MemorySpace.VMEM),   # fc bias
        ],
        out_specs=pl.BlockSpec(memory_space=pltpu.MemorySpace.VMEM),
        cost_estimate=cost,
    )(x2, wc, cb_pad, fcw_pad, fcb2)


# ----------------------------------- pure-JAX reference -----------------------------------
def reference_forward(x, conv_w, conv_b, fc_w, fc_b):
    B = x.shape[0]
    x2 = x.reshape(B, INPUT_CHANNELS)
    windows = jnp.stack([x2[:, k:k + L_CONV] for k in range(KERNEL_SIZE)], axis=-1)  # (B, L, K)
    conv = jnp.einsum("blk,ok->bol", windows, conv_w) + conv_b[None, :, None]        # (B, 20, L)
    trimmed = conv[:, :, : LP * POOL_SIZE].reshape(B, N_CONV, LP, POOL_SIZE)
    pooled = trimmed.max(axis=-1)                                                    # (B, 20, LP)
    flat = pooled.reshape(B, FEATURES_SIZE)
    return flat @ fc_w.T + fc_b


if __name__ == "__main__":
    key = jax.random.PRNGKey(0)
    k_conv, k_cb, k_fc, k_fb, k_x = jax.random.split(key, 5)

    # Weight init follows EmbeddingNet.weight_init style (uniform(-0.05, 0.05));
    # biases are given small nonzero values here to exercise the bias paths.
    conv_w = jax.random.uniform(k_conv, (N_CONV, KERNEL_SIZE),
                                minval=-0.05, maxval=0.05, dtype=jnp.float32)
    conv_b = jax.random.uniform(k_cb, (N_CONV,),
                                minval=-0.05, maxval=0.05, dtype=jnp.float32)
    fc_w = jax.random.uniform(k_fc, (FEATUREDIM, FEATURES_SIZE),
                              minval=-0.05, maxval=0.05, dtype=jnp.float32)
    fc_b = jax.random.uniform(k_fb, (FEATUREDIM,),
                              minval=-0.05, maxval=0.05, dtype=jnp.float32)

    x = jax.random.normal(k_x, (BATCH, INPUT_CHANNELS, 1, 1), dtype=jnp.float32)

    # One-time, call-invariant weight re-layout (hoisted out of the hot path).
    params = jax.tree_util.tree_map(jax.block_until_ready,
                                    prepare_params(conv_w, conv_b, fc_w, fc_b))

    out = embedding_net_forward(x, params)
    out = jax.block_until_ready(out)

    ref = reference_forward(x, conv_w, conv_b, fc_w, fc_b)
    assert out.shape == (BATCH, FEATUREDIM)
    assert jnp.allclose(out, ref, atol=1e-3, rtol=1e-2), "mismatch vs reference"

    print("KERNEL_OK")
</pallas_src>

<mosaic_0001>
module attributes {stable_mosaic.version = 11 : i64} {
  func.func @_embedding_kernel(%arg0: memref<8x64xf32, #tpu.memory_space<vmem>>, %arg1: memref<64x1280xf32, #tpu.memory_space<vmem>>, %arg2: memref<1x640xf32, #tpu.memory_space<vmem>>, %arg3: memref<640x32xf32, #tpu.memory_space<vmem>>, %arg4: memref<1x32xf32, #tpu.memory_space<vmem>>, %arg5: memref<8x32xf32, #tpu.memory_space<vmem>>) attributes {dimension_semantics = [], scalar_prefetch = 0 : i64, scratch_operands = 0 : i64, tpu.core_type = #tpu.core_type<tc>} {
    %c0 = arith.constant 0 : index
    %c0_0 = arith.constant 0 : index
    %0 = vector.load %arg0[%c0, %c0_0] : memref<8x64xf32, #tpu.memory_space<vmem>>, vector<8x64xf32>
    %c0_1 = arith.constant 0 : index
    %c0_2 = arith.constant 0 : index
    %1 = vector.load %arg1[%c0_1, %c0_2] : memref<64x1280xf32, #tpu.memory_space<vmem>>, vector<64x1280xf32>
    %cst = arith.constant dense<0.000000e+00> : vector<8x1280xf32>
    %2 = tpu.matmul %0, %1, %cst {dimension_numbers = #tpu.dot_dimension_numbers<[1], [0], [0], [1], [0, 0, 1, 1], [], []>} : vector<8x64xf32>, vector<64x1280xf32>, vector<8x1280xf32> -> vector<8x1280xf32>
    %3 = vector.extract_strided_slice %2 {offsets = [0, 0], sizes = [8, 640], strides = [1, 1]} : vector<8x1280xf32> to vector<8x640xf32>
    %4 = vector.extract_strided_slice %2 {offsets = [0, 640], sizes = [8, 640], strides = [1, 1]} : vector<8x1280xf32> to vector<8x640xf32>
    %5 = arith.maximumf %3, %4 : vector<8x640xf32>
    %c0_3 = arith.constant 0 : index
    %c0_4 = arith.constant 0 : index
    %6 = vector.load %arg2[%c0_3, %c0_4] : memref<1x640xf32, #tpu.memory_space<vmem>>, vector<1x640xf32>
    %7 = vector.broadcast %6 : vector<1x640xf32> to vector<8x640xf32>
    %8 = arith.addf %5, %7 : vector<8x640xf32>
    %c0_5 = arith.constant 0 : index
    %c0_6 = arith.constant 0 : index
    %9 = vector.load %arg3[%c0_5, %c0_6] : memref<640x32xf32, #tpu.memory_space<vmem>>, vector<640x32xf32>
    %cst_7 = arith.constant dense<0.000000e+00> : vector<8x32xf32>
    %10 = tpu.matmul %8, %9, %cst_7 {dimension_numbers = #tpu.dot_dimension_numbers<[1], [0], [0], [1], [0, 0, 1, 1], [], []>} : vector<8x640xf32>, vector<640x32xf32>, vector<8x32xf32> -> vector<8x32xf32>
    %c0_8 = arith.constant 0 : index
    %c0_9 = arith.constant 0 : index
    %11 = vector.load %arg4[%c0_8, %c0_9] : memref<1x32xf32, #tpu.memory_space<vmem>>, vector<1x32xf32>
    %12 = vector.broadcast %11 : vector<1x32xf32> to vector<8x32xf32>
    %13 = arith.addf %10, %12 : vector<8x32xf32>
    %c0_10 = arith.constant 0 : index
    %c0_11 = arith.constant 0 : index
    %14 = vector.load %arg5[%c0_10, %c0_11] : memref<8x32xf32, #tpu.memory_space<vmem>>, vector<8x32xf32>
    tpu.vector_store %arg5[%c0_10, %c0_11], %13 {strides = array<i32>} : memref<8x32xf32, #tpu.memory_space<vmem>>, vector<8x32xf32>,
    return
  }
}

</mosaic_0001>

<llo_original>
// kernel: tpu_custom_call.1
$region0: #{tpu_custom_call.1}
  #allocation0 [shape = 'u32[]', space=smem, size = 0x4, offset = 0x4, fixed_abs, tag = 'smem constant byte address 0x4 - core index']
  #allocation1 [shape = 'u32[144,128]{1,0:T(1,128)}', space=vmem, size = 0x12000, scoped, tag = 'internal scratch']
  %s0 = inlined_call_operand.vmem [shape: f32[8,64], index: 0, kind: input, shape index: {}]
  %s1 = inlined_call_operand.vmem [shape: f32[64,1280], index: 1, kind: input, shape index: {}]
  %s2 = inlined_call_operand.vmem [shape: f32[1,640], index: 2, kind: input, shape index: {}]
  %s3 = inlined_call_operand.vmem [shape: f32[640,32], index: 3, kind: input, shape index: {}]
  %s4 = inlined_call_operand.vmem [shape: f32[1,32], index: 4, kind: input, shape index: {}]
  %s5 = inlined_call_operand.hbm [shape: f32[8,32], index: 5, kind: output, shape index: {}]
  %s6 = sld [smem:[#allocation0]]
  $region30: #{tpu_custom_call.1} parent=0
    _
  %s8 = ssub.s32 1, %s6
  %s9 = scalar_select 0, %s8, %s6
  $region1: #{tpu_custom_call.1} parent=0
    #allocation2 [shape = 'u8[4096]{0}', space=vmem, size = 0x1000, scoped, tag = 'output window, operand 0, single buffered']
    #allocation3 [shape = 's32[1]{0}', space=sflag, size = 0x4, scoped, tag = 'scoped memory for tpu_custom_call.1']
    %10 = vsyncpa [#allocation3], 0
    // Predicated region
    $region2: #{tpu_custom_call.1} parent=1 // pred_check
      _
    $region3: #{tpu_custom_call.1} parent=1 // pred_check_branch
      %12 = sbr.rel (0) target = $region5
    $region4: #{tpu_custom_call.1} parent=1 // pred_region
      _
    $region5: #{tpu_custom_call.1} parent=1 // pred_fallthru
      _
    // Predicated region
    $region6: #{tpu_custom_call.1} parent=1 // pred_check
      _
    $region7: #{tpu_custom_call.1} parent=1 // pred_check_branch
      %14 = sbr.rel (0) target = $region9
    $region8: #{tpu_custom_call.1} parent=1 // pred_region
      _
    $region9: #{tpu_custom_call.1} parent=1 // pred_fallthru
      _
    // Predicated region
    $region10: #{tpu_custom_call.1} parent=1 // pred_check
      _
    $region11: #{tpu_custom_call.1} parent=1 // pred_check_branch
      %16 = sbr.rel (0) target = $region13
    $region12: #{tpu_custom_call.1} parent=1 // pred_region
      _
    $region13: #{tpu_custom_call.1} parent=1 // pred_fallthru
      _
    // Predicated region
    $region14: #{tpu_custom_call.1} parent=1 // pred_check
      _
    $region15: #{tpu_custom_call.1} parent=1 // pred_check_branch
      %18 = sbr.rel (0) target = $region17
    $region16: #{tpu_custom_call.1} parent=1 // pred_region
      _
    $region17: #{tpu_custom_call.1} parent=1 // pred_fallthru
      _
    // Predicated region
    $region18: #{tpu_custom_call.1} parent=1 // pred_check
      _
    $region19: #{tpu_custom_call.1} parent=1 // pred_check_branch
      %20 = sbr.rel (0) target = $region21
    $region20: #{tpu_custom_call.1} parent=1 // pred_region
      _
    $region21: #{tpu_custom_call.1} parent=1 // pred_fallthru
      _
    %v21 = vld [vmem:[%s0] sm:$0xff]
    %v22 = vld [vmem:[%s1] sm:$0xff]
    %v23 = vld [vmem:[%s1 + $0x8] sm:$0xff]
    %v24 = vld [vmem:[%s1 + $0x10] sm:$0xff]
    %v25 = vld [vmem:[%s1 + $0x18] sm:$0xff]
    %v26 = vld [vmem:[%s1 + $0x20] sm:$0xff]
    %v27 = vld [vmem:[%s1 + $0x28] sm:$0xff]
    %v28 = vld [vmem:[%s1 + $0x30] sm:$0xff]
    %v29 = vld [vmem:[%s1 + $0x38] sm:$0xff]
    %v30 = vld [vmem:[%s1 + $0x40] sm:$0xff]
    %v31 = vld [vmem:[%s1 + $0x48] sm:$0xff]
    %v32 = vld [vmem:[%s1 + $0x50] sm:$0xff]
    %v33 = vld [vmem:[%s1 + $0x58] sm:$0xff]
    %v34 = vld [vmem:[%s1 + $0x60] sm:$0xff]
    %v35 = vld [vmem:[%s1 + $0x68] sm:$0xff]
    %v36 = vld [vmem:[%s1 + $0x70] sm:$0xff]
    %v37 = vld [vmem:[%s1 + $0x78] sm:$0xff]
    %v38 = vld [vmem:[%s1 + $0x80] sm:$0xff]
    %v39 = vld [vmem:[%s1 + $0x88] sm:$0xff]
    %v40 = vld [vmem:[%s1 + $0x90] sm:$0xff]
    %v41 = vld [vmem:[%s1 + $0x98] sm:$0xff]
    %v42 = vld [vmem:[%s1 + $0xa0] sm:$0xff]
    %v43 = vld [vmem:[%s1 + $0xa8] sm:$0xff]
    %v44 = vld [vmem:[%s1 + $0xb0] sm:$0xff]
    %v45 = vld [vmem:[%s1 + $0xb8] sm:$0xff]
    %v46 = vld [vmem:[%s1 + $0xc0] sm:$0xff]
    %v47 = vld [vmem:[%s1 + $0xc8] sm:$0xff]
    %v48 = vld [vmem:[%s1 + $0xd0] sm:$0xff]
    %v49 = vld [vmem:[%s1 + $0xd8] sm:$0xff]
    %v50 = vld [vmem:[%s1 + $0xe0] sm:$0xff]
    %v51 = vld [vmem:[%s1 + $0xe8] sm:$0xff]
    %v52 = vld [vmem:[%s1 + $0xf0] sm:$0xff]
    %v53 = vld [vmem:[%s1 + $0xf8] sm:$0xff]
    %v54 = vld [vmem:[%s1 + $0x100] sm:$0xff]
    %v55 = vld [vmem:[%s1 + $0x108] sm:$0xff]
    %v56 = vld [vmem:[%s1 + $0x110] sm:$0xff]
    %v57 = vld [vmem:[%s1 + $0x118] sm:$0xff]
    %v58 = vld [vmem:[%s1 + $0x120] sm:$0xff]
    %v59 = vld [vmem:[%s1 + $0x128] sm:$0xff]
    %v60 = vld [vmem:[%s1 + $0x130] sm:$0xff]
    %v61 = vld [vmem:[%s1 + $0x138] sm:$0xff]
    %v62 = vld [vmem:[%s1 + $0x140] sm:$0xff]
    %v63 = vld [vmem:[%s1 + $0x148] sm:$0xff]
    %v64 = vld [vmem:[%s1 + $0x150] sm:$0xff]
    %v65 = vld [vmem:[%s1 + $0x158] sm:$0xff]
    %v66 = vld [vmem:[%s1 + $0x160] sm:$0xff]
    %v67 = vld [vmem:[%s1 + $0x168] sm:$0xff]
    %v68 = vld [vmem:[%s1 + $0x170] sm:$0xff]
    %v69 = vld [vmem:[%s1 + $0x178] sm:$0xff]
    %v70 = vld [vmem:[%s1 + $0x180] sm:$0xff]
    %v71 = vld [vmem:[%s1 + $0x188] sm:$0xff]
    %v72 = vld [vmem:[%s1 + $0x190] sm:$0xff]
    %v73 = vld [vmem:[%s1 + $0x198] sm:$0xff]
    %v74 = vld [vmem:[%s1 + $0x1a0] sm:$0xff]
    %v75 = vld [vmem:[%s1 + $0x1a8] sm:$0xff]
    %v76 = vld [vmem:[%s1 + $0x1b0] sm:$0xff]
    %v77 = vld [vmem:[%s1 + $0x1b8] sm:$0xff]
    %v78 = vld [vmem:[%s1 + $0x1c0] sm:$0xff]
    %v79 = vld [vmem:[%s1 + $0x1c8] sm:$0xff]
    %v80 = vld [vmem:[%s1 + $0x1d0] sm:$0xff]
    %v81 = vld [vmem:[%s1 + $0x1d8] sm:$0xff]
    %v82 = vld [vmem:[%s1 + $0x1e0] sm:$0xff]
    %v83 = vld [vmem:[%s1 + $0x1e8] sm:$0xff]
    %v84 = vld [vmem:[%s1 + $0x1f0] sm:$0xff]
    %v85 = vld [vmem:[%s1 + $0x1f8] sm:$0xff]
    %v86 = vld [vmem:[%s1 + $0x200] sm:$0xff]
    %v87 = vld [vmem:[%s1 + $0x208] sm:$0xff]
    %v88 = vld [vmem:[%s1 + $0x210] sm:$0xff]
    %v89 = vld [vmem:[%s1 + $0x218] sm:$0xff]
    %v90 = vld [vmem:[%s1 + $0x220] sm:$0xff]
    %v91 = vld [vmem:[%s1 + $0x228] sm:$0xff]
    %v92 = vld [vmem:[%s1 + $0x230] sm:$0xff]
    %v93 = vld [vmem:[%s1 + $0x238] sm:$0xff]
    %v94 = vld [vmem:[%s1 + $0x240] sm:$0xff]
    %v95 = vld [vmem:[%s1 + $0x248] sm:$0xff]
    %v96 = vld [vmem:[%s1 + $0x250] sm:$0xff]
    %v97 = vld [vmem:[%s1 + $0x258] sm:$0xff]
    %v98 = vld [vmem:[%s1 + $0x260] sm:$0xff]
    %v99 = vld [vmem:[%s1 + $0x268] sm:$0xff]
    %v100 = vld [vmem:[%s1 + $0x270] sm:$0xff]
    %v101 = vld [vmem:[%s1 + $0x278] sm:$0xff]
    %vm102 = vcmask 523264
    %v104 = vsel %vm102, %v21, 0
    %106 = vmatprep.subr.mxu0 0.0
    %107 = vmatpush1.msra.mxu0 0.0
    %108 = vmatprep.subr.mxu0 0.0
    %109 = vmatpush1.msra.mxu0 0.0
    %110 = vmatprep.subr.mxu0 0.0
    %111 = vmatpush1.msra.mxu0 0.0
    %112 = vmatprep.subr.mxu0 0.0
    %113 = vmatpush1.msra.mxu0 0.0
    %114 = vmatprep.subr.mxu0 0.0
    %115 = vmatpush1.msra.mxu0 0.0
    %116 = vmatprep.subr.mxu0 0.0
    %117 = vmatpush1.msra.mxu0 0.0
    %118 = vmatprep.subr.mxu0 0.0
    %119 = vmatpush1.msra.mxu0 0.0
    %120 = vmatprep.subr.mxu0 0.0
    %121 = vmatpush1.msra.mxu0 0.0
    %122 = vmatprep.subr.mxu0 %v93
    %123 = vmatpush1.msra.mxu0 %v92
    %124 = vmatprep.subr.mxu0 %v83
    %125 = vmatpush1.msra.mxu0 %v82
    %126 = vmatprep.subr.mxu0 %v73
    %127 = vmatpush1.msra.mxu0 %v72
    %128 = vmatprep.subr.mxu0 %v63
    %129 = vmatpush1.msra.mxu0 %v62
    %130 = vmatprep.subr.mxu0 %v53
    %131 = vmatpush1.msra.mxu0 %v52
    %132 = vmatprep.subr.mxu0 %v43
    %133 = vmatpush1.msra.mxu0 %v42
    %134 = vmatprep.subr.mxu0 %v33
    %135 = vmatpush1.msra.mxu0 %v32
    %136 = vmatprep.subr.mxu0 %v23
    %137 = vmatpush1.msra.mxu0 %v22
    %138 = vmatprep.subr.mxu0 0.0
    %139 = vmatpush2.msra.mxu0 0.0
    %140 = vmatprep.subr.mxu0 0.0
    %141 = vmatpush2.msra.mxu0 0.0
    %142 = vmatprep.subr.mxu0 0.0
    %143 = vmatpush2.msra.mxu0 0.0
    %144 = vmatprep.subr.mxu0 0.0
    %145 = vmatpush2.msra.mxu0 0.0
    %146 = vmatprep.subr.mxu0 0.0
    %147 = vmatpush2.msra.mxu0 0.0
    %148 = vmatprep.subr.mxu0 0.0
    %149 = vmatpush2.msra.mxu0 0.0
    %150 = vmatprep.subr.mxu0 0.0
    %151 = vmatpush2.msra.mxu0 0.0
    %152 = vmatprep.subr.mxu0 0.0
    %153 = vmatpush2.msra.mxu0 0.0
    %154 = vmatprep.subr.mxu0 0.0
    %155 = vmatpush2.msra.mxu0 0.0
    %156 = vmatprep.subr.mxu0 0.0
    %157 = vmatpush2.msra.mxu0 0.0
    %158 = vmatprep.subr.mxu0 0.0
    %159 = vmatpush2.msra.mxu0 0.0
    %160 = vmatprep.subr.mxu0 0.0
    %161 = vmatpush2.msra.mxu0 0.0
    %162 = vmatprep.subr.mxu0 0.0
    %163 = vmatpush2.msra.mxu0 0.0
    %164 = vmatprep.subr.mxu0 0.0
    %165 = vmatpush2.msra.mxu0 0.0
    %166 = vmatprep.subr.mxu0 0.0
    %167 = vmatpush2.msra.mxu0 0.0
    %168 = vmatprep.subr.mxu0 0.0
    %169 = vmatpush2.msra.mxu0 0.0
    %170 = vmatprep.mubr.f32.mxu0 0.0
    %171 = vmatmul.mubr.f32.gmra.mxu0 %v104
    %v172 = vpop.f32.mrf.mxu0
    %v173 = vadd.f32 0.0, %v172
    %v174 = vpop.f32.mrf.mxu0
    %v175 = vadd.f32 0.0, %v174
    %176 = vdwg.mxu0
    %177 = vmatprep.subr.mxu0 0.0
    %178 = vmatpush1.msra.mxu0 0.0
    %179 = vmatprep.subr.mxu0 0.0
    %180 = vmatpush1.msra.mxu0 0.0
    %181 = vmatprep.subr.mxu0 0.0
    %182 = vmatpush1.msra.mxu0 0.0
    %183 = vmatprep.subr.mxu0 0.0
    %184 = vmatpush1.msra.mxu0 0.0
    %185 = vmatprep.subr.mxu0 0.0
    %186 = vmatpush1.msra.mxu0 0.0
    %187 = vmatprep.subr.mxu0 0.0
    %188 = vmatpush1.msra.mxu0 0.0
    %189 = vmatprep.subr.mxu0 0.0
    %190 = vmatpush1.msra.mxu0 0.0
    %191 = vmatprep.subr.mxu0 0.0
    %192 = vmatpush1.msra.mxu0 0.0
    %193 = vmatprep.subr.mxu0 %v95
    %194 = vmatpush1.msra.mxu0 %v94
    %195 = vmatprep.subr.mxu0 %v85
    %196 = vmatpush1.msra.mxu0 %v84
    %197 = vmatprep.subr.mxu0 %v75
    %198 = vmatpush1.msra.mxu0 %v74
    %199 = vmatprep.subr.mxu0 %v65
    %200 = vmatpush1.msra.mxu0 %v64
    %201 = vmatprep.subr.mxu0 %v55
    %202 = vmatpush1.msra.mxu0 %v54
    %203 = vmatprep.subr.mxu0 %v45
    %204 = vmatpush1.msra.mxu0 %v44
    %205 = vmatprep.subr.mxu0 %v35
    %206 = vmatpush1.msra.mxu0 %v34
    %207 = vmatprep.subr.mxu0 %v25
    %208 = vmatpush1.msra.mxu0 %v24
    %209 = vmatprep.subr.mxu0 0.0
    %210 = vmatpush2.msra.mxu0 0.0
    %211 = vmatprep.subr.mxu0 0.0
    %212 = vmatpush2.msra.mxu0 0.0
    %213 = vmatprep.subr.mxu0 0.0
    %214 = vmatpush2.msra.mxu0 0.0
    %215 = vmatprep.subr.mxu0 0.0
    %216 = vmatpush2.msra.mxu0 0.0
    %217 = vmatprep.subr.mxu0 0.0
    %218 = vmatpush2.msra.mxu0 0.0
    %219 = vmatprep.subr.mxu0 0.0
    %220 = vmatpush2.msra.mxu0 0.0
    %221 = vmatprep.subr.mxu0 0.0
    %222 = vmatpush2.msra.mxu0 0.0
    %223 = vmatprep.subr.mxu0 0.0
    %224 = vmatpush2.msra.mxu0 0.0
    %225 = vmatprep.subr.mxu0 0.0
    %226 = vmatpush2.msra.mxu0 0.0
    %227 = vmatprep.subr.mxu0 0.0
    %228 = vmatpush2.msra.mxu0 0.0
    %229 = vmatprep.subr.mxu0 0.0
    %230 = vmatpush2.msra.mxu0 0.0
    %231 = vmatprep.subr.mxu0 0.0
    %232 = vmatpush2.msra.mxu0 0.0
    %233 = vmatprep.subr.mxu0 0.0
    %234 = vmatpush2.msra.mxu0 0.0
    %235 = vmatprep.subr.mxu0 0.0
    %236 = vmatpush2.msra.mxu0 0.0
    %237 = vmatprep.subr.mxu0 0.0
    %238 = vmatpush2.msra.mxu0 0.0
    %239 = vmatprep.subr.mxu0 0.0
    %240 = vmatpush2.msra.mxu0 0.0
    %241 = vmatprep.mubr.f32.mxu0 0.0
    %242 = vmatmul.mubr.f32.gmra.mxu0 %v104
    %v243 = vpop.f32.mrf.mxu0
    %v244 = vadd.f32 0.0, %v243
    %v245 = vpop.f32.mrf.mxu0
    %v246 = vadd.f32 0.0, %v245
    %247 = vdwg.mxu0
    %248 = vmatprep.subr.mxu0 0.0
    %249 = vmatpush1.msra.mxu0 0.0
    %250 = vmatprep.subr.mxu0 0.0
    %251 = vmatpush1.msra.mxu0 0.0
    %252 = vmatprep.subr.mxu0 0.0
    %253 = vmatpush1.msra.mxu0 0.0
    %254 = vmatprep.subr.mxu0 0.0
    %255 = vmatpush1.msra.mxu0 0.0
    %256 = vmatprep.subr.mxu0 0.0
    %257 = vmatpush1.msra.mxu0 0.0
    %258 = vmatprep.subr.mxu0 0.0
    %259 = vmatpush1.msra.mxu0 0.0
    %260 = vmatprep.subr.mxu0 0.0
    %261 = vmatpush1.msra.mxu0 0.0
    %262 = vmatprep.subr.mxu0 0.0
    %263 = vmatpush1.msra.mxu0 0.0
    %264 = vmatprep.subr.mxu0 %v97
    %265 = vmatpush1.msra.mxu0 %v96
    %266 = vmatprep.subr.mxu0 %v87
    %267 = vmatpush1.msra.mxu0 %v86
    %268 = vmatprep.subr.mxu0 %v77
    %269 = vmatpush1.msra.mxu0 %v76
    %270 = vmatprep.subr.mxu0 %v67
    %271 = vmatpush1.msra.mxu0 %v66
    %272 = vmatprep.subr.mxu0 %v57
    %273 = vmatpush1.msra.mxu0 %v56
    %274 = vmatprep.subr.mxu0 %v47
    %275 = vmatpush1.msra.mxu0 %v46
    %276 = vmatprep.subr.mxu0 %v37
    %277 = vmatpush1.msra.mxu0 %v36
    %278 = vmatprep.subr.mxu0 %v27
    %279 = vmatpush1.msra.mxu0 %v26
    %280 = vmatprep.subr.mxu0 0.0
    %281 = vmatpush2.msra.mxu0 0.0
    %282 = vmatprep.subr.mxu0 0.0
    %283 = vmatpush2.msra.mxu0 0.0
    %284 = vmatprep.subr.mxu0 0.0
    %285 = vmatpush2.msra.mxu0 0.0
    %286 = vmatprep.subr.mxu0 0.0
    %287 = vmatpush2.msra.mxu0 0.0
    %288 = vmatprep.subr.mxu0 0.0
    %289 = vmatpush2.msra.mxu0 0.0
    %290 = vmatprep.subr.mxu0 0.0
    %291 = vmatpush2.msra.mxu0 0.0
    %292 = vmatprep.subr.mxu0 0.0
    %293 = vmatpush2.msra.mxu0 0.0
    %294 = vmatprep.subr.mxu0 0.0
    %295 = vmatpush2.msra.mxu0 0.0
    %296 = vmatprep.subr.mxu0 0.0
    %297 = vmatpush2.msra.mxu0 0.0
    %298 = vmatprep.subr.mxu0 0.0
    %299 = vmatpush2.msra.mxu0 0.0
    %300 = vmatprep.subr.mxu0 0.0
    %301 = vmatpush2.msra.mxu0 0.0
    %302 = vmatprep.subr.mxu0 0.0
    %303 = vmatpush2.msra.mxu0 0.0
    %304 = vmatprep.subr.mxu0 0.0
    %305 = vmatpush2.msra.mxu0 0.0
    %306 = vmatprep.subr.mxu0 0.0
    %307 = vmatpush2.msra.mxu0 0.0
    %308 = vmatprep.subr.mxu0 0.0
    %309 = vmatpush2.msra.mxu0 0.0
    %310 = vmatprep.subr.mxu0 0.0
    %311 = vmatpush2.msra.mxu0 0.0
    %312 = vmatprep.mubr.f32.mxu0 0.0
    %313 = vmatmul.mubr.f32.gmra.mxu0 %v104
    %v314 = vpop.f32.mrf.mxu0
    %v315 = vadd.f32 0.0, %v314
    %v316 = vpop.f32.mrf.mxu0
    %v317 = vadd.f32 0.0, %v316
    %318 = vdwg.mxu0
    %319 = vmatprep.subr.mxu0 0.0
    %320 = vmatpush1.msra.mxu0 0.0
    %321 = vmatprep.subr.mxu0 0.0
    %322 = vmatpush1.msra.mxu0 0.0
    %323 = vmatprep.subr.mxu0 0.0
    %324 = vmatpush1.msra.mxu0 0.0
    %325 = vmatprep.subr.mxu0 0.0
    %326 = vmatpush1.msra.mxu0 0.0
    %327 = vmatprep.subr.mxu0 0.0
    %328 = vmatpush1.msra.mxu0 0.0
    %329 = vmatprep.subr.mxu0 0.0
    %330 = vmatpush1.msra.mxu0 0.0
    %331 = vmatprep.subr.mxu0 0.0
    %332 = vmatpush1.msra.mxu0 0.0
    %333 = vmatprep.subr.mxu0 0.0
    %334 = vmatpush1.msra.mxu0 0.0
    %335 = vmatprep.subr.mxu0 %v99
    %336 = vmatpush1.msra.mxu0 %v98
    %337 = vmatprep.subr.mxu0 %v89
    %338 = vmatpush1.msra.mxu0 %v88
    %339 = vmatprep.subr.mxu0 %v79
    %340 = vmatpush1.msra.mxu0 %v78
    %341 = vmatprep.subr.mxu0 %v69
    %342 = vmatpush1.msra.mxu0 %v68
    %343 = vmatprep.subr.mxu0 %v59
    %344 = vmatpush1.msra.mxu0 %v58
    %345 = vmatprep.subr.mxu0 %v49
    %346 = vmatpush1.msra.mxu0 %v48
    %347 = vmatprep.subr.mxu0 %v39
    %348 = vmatpush1.msra.mxu0 %v38
    %349 = vmatprep.subr.mxu0 %v29
    %350 = vmatpush1.msra.mxu0 %v28
    %351 = vmatprep.subr.mxu0 0.0
    %352 = vmatpush2.msra.mxu0 0.0
    %353 = vmatprep.subr.mxu0 0.0
    %354 = vmatpush2.msra.mxu0 0.0
    %355 = vmatprep.subr.mxu0 0.0
    %356 = vmatpush2.msra.mxu0 0.0
    %357 = vmatprep.subr.mxu0 0.0
    %358 = vmatpush2.msra.mxu0 0.0
    %359 = vmatprep.subr.mxu0 0.0
    %360 = vmatpush2.msra.mxu0 0.0
    %361 = vmatprep.subr.mxu0 0.0
    %362 = vmatpush2.msra.mxu0 0.0
    %363 = vmatprep.subr.mxu0 0.0
    %364 = vmatpush2.msra.mxu0 0.0
    %365 = vmatprep.subr.mxu0 0.0
    %366 = vmatpush2.msra.mxu0 0.0
    %367 = vmatprep.subr.mxu0 0.0
    %368 = vmatpush2.msra.mxu0 0.0
    %369 = vmatprep.subr.mxu0 0.0
    %370 = vmatpush2.msra.mxu0 0.0
    %371 = vmatprep.subr.mxu0 0.0
    %372 = vmatpush2.msra.mxu0 0.0
    %373 = vmatprep.subr.mxu0 0.0
    %374 = vmatpush2.msra.mxu0 0.0
    %375 = vmatprep.subr.mxu0 0.0
    %376 = vmatpush2.msra.mxu0 0.0
    %377 = vmatprep.subr.mxu0 0.0
    %378 = vmatpush2.msra.mxu0 0.0
    %379 = vmatprep.subr.mxu0 0.0
    %380 = vmatpush2.msra.mxu0 0.0
    %381 = vmatprep.subr.mxu0 0.0
    %382 = vmatpush2.msra.mxu0 0.0
    %383 = vmatprep.mubr.f32.mxu0 0.0
    %384 = vmatmul.mubr.f32.gmra.mxu0 %v104
    %v385 = vpop.f32.mrf.mxu0
    %v386 = vadd.f32 0.0, %v385
    %v387 = vpop.f32.mrf.mxu0
    %v388 = vadd.f32 0.0, %v387
    %389 = vdwg.mxu0
    %390 = vmatprep.subr.mxu0 0.0
    %391 = vmatpush1.msra.mxu0 0.0
    %392 = vmatprep.subr.mxu0 0.0
    %393 = vmatpush1.msra.mxu0 0.0
    %394 = vmatprep.subr.mxu0 0.0
    %395 = vmatpush1.msra.mxu0 0.0
    %396 = vmatprep.subr.mxu0 0.0
    %397 = vmatpush1.msra.mxu0 0.0
    %398 = vmatprep.subr.mxu0 0.0
    %399 = vmatpush1.msra.mxu0 0.0
    %400 = vmatprep.subr.mxu0 0.0
    %401 = vmatpush1.msra.mxu0 0.0
    %402 = vmatprep.subr.mxu0 0.0
    %403 = vmatpush1.msra.mxu0 0.0
    %404 = vmatprep.subr.mxu0 0.0
    %405 = vmatpush1.msra.mxu0 0.0
    %406 = vmatprep.subr.mxu0 %v101
    %407 = vmatpush1.msra.mxu0 %v100
    %408 = vmatprep.subr.mxu0 %v91
    %409 = vmatpush1.msra.mxu0 %v90
    %410 = vmatprep.subr.mxu0 %v81
    %411 = vmatpush1.msra.mxu0 %v80
    %412 = vmatprep.subr.mxu0 %v71
    %413 = vmatpush1.msra.mxu0 %v70
    %414 = vmatprep.subr.mxu0 %v61
    %415 = vmatpush1.msra.mxu0 %v60
    %416 = vmatprep.subr.mxu0 %v51
    %417 = vmatpush1.msra.mxu0 %v50
    %418 = vmatprep.subr.mxu0 %v41
    %419 = vmatpush1.msra.mxu0 %v40
    %420 = vmatprep.subr.mxu0 %v31
    %421 = vmatpush1.msra.mxu0 %v30
    %422 = vmatprep.subr.mxu0 0.0
    %423 = vmatpush2.msra.mxu0 0.0
    %424 = vmatprep.subr.mxu0 0.0
    %425 = vmatpush2.msra.mxu0 0.0
    %426 = vmatprep.subr.mxu0 0.0
    %427 = vmatpush2.msra.mxu0 0.0
    %428 = vmatprep.subr.mxu0 0.0
    %429 = vmatpush2.msra.mxu0 0.0
    %430 = vmatprep.subr.mxu0 0.0
    %431 = vmatpush2.msra.mxu0 0.0
    %432 = vmatprep.subr.mxu0 0.0
    %433 = vmatpush2.msra.mxu0 0.0
    %434 = vmatprep.subr.mxu0 0.0
    %435 = vmatpush2.msra.mxu0 0.0
    %436 = vmatprep.subr.mxu0 0.0
    %437 = vmatpush2.msra.mxu0 0.0
    %438 = vmatprep.subr.mxu0 0.0
    %439 = vmatpush2.msra.mxu0 0.0
    %440 = vmatprep.subr.mxu0 0.0
    %441 = vmatpush2.msra.mxu0 0.0
    %442 = vmatprep.subr.mxu0 0.0
    %443 = vmatpush2.msra.mxu0 0.0
    %444 = vmatprep.subr.mxu0 0.0
    %445 = vmatpush2.msra.mxu0 0.0
    %446 = vmatprep.subr.mxu0 0.0
    %447 = vmatpush2.msra.mxu0 0.0
    %448 = vmatprep.subr.mxu0 0.0
    %449 = vmatpush2.msra.mxu0 0.0
    %450 = vmatprep.subr.mxu0 0.0
    %451 = vmatpush2.msra.mxu0 0.0
    %452 = vmatprep.subr.mxu0 0.0
    %453 = vmatpush2.msra.mxu0 0.0
    %454 = vmatprep.mubr.f32.mxu0 0.0
    %455 = vmatmul.mubr.f32.gmra.mxu0 %v104
    %v456 = vpop.f32.mrf.mxu0
    %v457 = vadd.f32 0.0, %v456
    %v458 = vpop.f32.mrf.mxu0
    %v459 = vadd.f32 0.0, %v458
    %460 = vdwg.mxu0
    %v461 = vmax.f32 %v173, %v317
    %v462 = vmax.f32 %v175, %v386
    %v463 = vmax.f32 %v244, %v388
    %v464 = vmax.f32 %v246, %v457
    %v465 = vmax.f32 %v315, %v459
    %v466 = vld [vmem:[%s2] sm:$0x1f]
    %v468 = vlaneseq
    %v469 = vshrl.u32 %v468, 7
    %v470 = vsub.s32 0, %v469
    %v471 = vrot.slane %v466, %v470
    %v472 = vlaneseq
    %v473 = vshrl.u32 %v472, 7
    %v474 = vsub.s32 1, %v473
    %v475 = vrot.slane %v466, %v474
    %v476 = vlaneseq
    %v477 = vshrl.u32 %v476, 7
    %v478 = vsub.s32 2, %v477
    %v479 = vrot.slane %v466, %v478
    %v480 = vlaneseq
    %v481 = vshrl.u32 %v480, 7
    %v482 = vsub.s32 3, %v481
    %v483 = vrot.slane %v466, %v482
    %v484 = vlaneseq
    %v485 = vshrl.u32 %v484, 7
    %v486 = vsub.s32 4, %v485
    %v487 = vrot.slane %v466, %v486
    %v493 = vadd.f32 %v461, %v471
    %v494 = vadd.f32 %v462, %v475
    %v495 = vadd.f32 %v463, %v479
    %v496 = vadd.f32 %v464, %v483
    %v497 = vadd.f32 %v465, %v487
    %v498 = vld [vmem:[%s3] sm:$0xff]
    %v499 = vld [vmem:[%s3 + $0x8] sm:$0xff]
    %v500 = vld [vmem:[%s3 + $0x10] sm:$0xff]
    %v501 = vld [vmem:[%s3 + $0x18] sm:$0xff]
    %v502 = vld [vmem:[%s3 + $0x20] sm:$0xff]
    %v503 = vld [vmem:[%s3 + $0x28] sm:$0xff]
    %v504 = vld [vmem:[%s3 + $0x30] sm:$0xff]
    %v505 = vld [vmem:[%s3 + $0x38] sm:$0xff]
    %v506 = vld [vmem:[%s3 + $0x40] sm:$0xff]
    %v507 = vld [vmem:[%s3 + $0x48] sm:$0xff]
    %v508 = vld [vmem:[%s3 + $0x50] sm:$0xff]
    %v509 = vld [vmem:[%s3 + $0x58] sm:$0xff]
    %v510 = vld [vmem:[%s3 + $0x60] sm:$0xff]
    %v511 = vld [vmem:[%s3 + $0x68] sm:$0xff]
    %v512 = vld [vmem:[%s3 + $0x70] sm:$0xff]
    %v513 = vld [vmem:[%s3 + $0x78] sm:$0xff]
    %v514 = vld [vmem:[%s3 + $0x80] sm:$0xff]
    %v515 = vld [vmem:[%s3 + $0x88] sm:$0xff]
    %v516 = vld [vmem:[%s3 + $0x90] sm:$0xff]
    %v517 = vld [vmem:[%s3 + $0x98] sm:$0xff]
    %v518 = vld [vmem:[%s3 + $0xa0] sm:$0xff]
    %v519 = vld [vmem:[%s3 + $0xa8] sm:$0xff]
    %v520 = vld [vmem:[%s3 + $0xb0] sm:$0xff]
    %v521 = vld [vmem:[%s3 + $0xb8] sm:$0xff]
    %v522 = vld [vmem:[%s3 + $0xc0] sm:$0xff]
    %v523 = vld [vmem:[%s3 + $0xc8] sm:$0xff]
    %v524 = vld [vmem:[%s3 + $0xd0] sm:$0xff]
    %v525 = vld [vmem:[%s3 + $0xd8] sm:$0xff]
    %v526 = vld [vmem:[%s3 + $0xe0] sm:$0xff]
    %v527 = vld [vmem:[%s3 + $0xe8] sm:$0xff]
    %v528 = vld [vmem:[%s3 + $0xf0] sm:$0xff]
    %v529 = vld [vmem:[%s3 + $0xf8] sm:$0xff]
    %v530 = vld [vmem:[%s3 + $0x100] sm:$0xff]
    %v531 = vld [vmem:[%s3 + $0x108] sm:$0xff]
    %v532 = vld [vmem:[%s3 + $0x110] sm:$0xff]
    %v533 = vld [vmem:[%s3 + $0x118] sm:$0xff]
    %v534 = vld [vmem:[%s3 + $0x120] sm:$0xff]
    %v535 = vld [vmem:[%s3 + $0x128] sm:$0xff]
    %v536 = vld [vmem:[%s3 + $0x130] sm:$0xff]
    %v537 = vld [vmem:[%s3 + $0x138] sm:$0xff]
    %v538 = vld [vmem:[%s3 + $0x140] sm:$0xff]
    %v539 = vld [vmem:[%s3 + $0x148] sm:$0xff]
    %v540 = vld [vmem:[%s3 + $0x150] sm:$0xff]
    %v541 = vld [vmem:[%s3 + $0x158] sm:$0xff]
    %v542 = vld [vmem:[%s3 + $0x160] sm:$0xff]
    %v543 = vld [vmem:[%s3 + $0x168] sm:$0xff]
    %v544 = vld [vmem:[%s3 + $0x170] sm:$0xff]
    %v545 = vld [vmem:[%s3 + $0x178] sm:$0xff]
    %v546 = vld [vmem:[%s3 + $0x180] sm:$0xff]
    %v547 = vld [vmem:[%s3 + $0x188] sm:$0xff]
    %v548 = vld [vmem:[%s3 + $0x190] sm:$0xff]
    %v549 = vld [vmem:[%s3 + $0x198] sm:$0xff]
    %v550 = vld [vmem:[%s3 + $0x1a0] sm:$0xff]
    %v551 = vld [vmem:[%s3 + $0x1a8] sm:$0xff]
    %v552 = vld [vmem:[%s3 + $0x1b0] sm:$0xff]
    %v553 = vld [vmem:[%s3 + $0x1b8] sm:$0xff]
    %v554 = vld [vmem:[%s3 + $0x1c0] sm:$0xff]
    %v555 = vld [vmem:[%s3 + $0x1c8] sm:$0xff]
    %v556 = vld [vmem:[%s3 + $0x1d0] sm:$0xff]
    %v557 = vld [vmem:[%s3 + $0x1d8] sm:$0xff]
    %v558 = vld [vmem:[%s3 + $0x1e0] sm:$0xff]
    %v559 = vld [vmem:[%s3 + $0x1e8] sm:$0xff]
    %v560 = vld [vmem:[%s3 + $0x1f0] sm:$0xff]
    %v561 = vld [vmem:[%s3 + $0x1f8] sm:$0xff]
    %v562 = vld [vmem:[%s3 + $0x200] sm:$0xff]
    %v563 = vld [vmem:[%s3 + $0x208] sm:$0xff]
    %v564 = vld [vmem:[%s3 + $0x210] sm:$0xff]
    %v565 = vld [vmem:[%s3 + $0x218] sm:$0xff]
    %v566 = vld [vmem:[%s3 + $0x220] sm:$0xff]
    %v567 = vld [vmem:[%s3 + $0x228] sm:$0xff]
    %v568 = vld [vmem:[%s3 + $0x230] sm:$0xff]
    %v569 = vld [vmem:[%s3 + $0x238] sm:$0xff]
    %v570 = vld [vmem:[%s3 + $0x240] sm:$0xff]
    %v571 = vld [vmem:[%s3 + $0x248] sm:$0xff]
    %v572 = vld [vmem:[%s3 + $0x250] sm:$0xff]
    %v573 = vld [vmem:[%s3 + $0x258] sm:$0xff]
    %v574 = vld [vmem:[%s3 + $0x260] sm:$0xff]
    %v575 = vld [vmem:[%s3 + $0x268] sm:$0xff]
    %v576 = vld [vmem:[%s3 + $0x270] sm:$0xff]
    %v577 = vld [vmem:[%s3 + $0x278] sm:$0xff]
    %v578 = vld [vmem:[%s4] sm:$0x1]
    %v580 = vlaneseq
    %v581 = vshrl.u32 %v580, 7
    %v582 = vsub.s32 0, %v581
    %v583 = vrot.slane %v578, %v582
    %585 = vmatprep.subr.mxu0 0.0
    %586 = vmatpush1.msra.mxu0 %v513
    %587 = vmatprep.subr.mxu0 0.0
    %588 = vmatpush1.msra.mxu0 %v512
    %589 = vmatprep.subr.mxu0 0.0
    %590 = vmatpush1.msra.mxu0 %v511
    %591 = vmatprep.subr.mxu0 0.0
    %592 = vmatpush1.msra.mxu0 %v510
    %593 = vmatprep.subr.mxu0 0.0
    %594 = vmatpush1.msra.mxu0 %v509
    %595 = vmatprep.subr.mxu0 0.0
    %596 = vmatpush1.msra.mxu0 %v508
    %597 = vmatprep.subr.mxu0 0.0
    %598 = vmatpush1.msra.mxu0 %v507
    %599 = vmatprep.subr.mxu0 0.0
    %600 = vmatpush1.msra.mxu0 %v506
    %601 = vmatprep.subr.mxu0 0.0
    %602 = vmatpush1.msra.mxu0 %v505
    %603 = vmatprep.subr.mxu0 0.0
    %604 = vmatpush1.msra.mxu0 %v504
    %605 = vmatprep.subr.mxu0 0.0
    %606 = vmatpush1.msra.mxu0 %v503
    %607 = vmatprep.subr.mxu0 0.0
    %608 = vmatpush1.msra.mxu0 %v502
    %609 = vmatprep.subr.mxu0 0.0
    %610 = vmatpush1.msra.mxu0 %v501
    %611 = vmatprep.subr.mxu0 0.0
    %612 = vmatpush1.msra.mxu0 %v500
    %613 = vmatprep.subr.mxu0 0.0
    %614 = vmatpush1.msra.mxu0 %v499
    %615 = vmatprep.subr.mxu0 0.0
    %616 = vmatpush1.msra.mxu0 %v498
    %617 = vmatprep.subr.mxu0 0.0
    %618 = vmatpush2.msra.mxu0 %v529
    %619 = vmatprep.subr.mxu0 0.0
    %620 = vmatpush2.msra.mxu0 %v528
    %621 = vmatprep.subr.mxu0 0.0
    %622 = vmatpush2.msra.mxu0 %v527
    %623 = vmatprep.subr.mxu0 0.0
    %624 = vmatpush2.msra.mxu0 %v526
    %625 = vmatprep.subr.mxu0 0.0
    %626 = vmatpush2.msra.mxu0 %v525
    %627 = vmatprep.subr.mxu0 0.0
    %628 = vmatpush2.msra.mxu0 %v524
    %629 = vmatprep.subr.mxu0 0.0
    %630 = vmatpush2.msra.mxu0 %v523
    %631 = vmatprep.subr.mxu0 0.0
    %632 = vmatpush2.msra.mxu0 %v522
    %633 = vmatprep.subr.mxu0 0.0
    %634 = vmatpush2.msra.mxu0 %v521
    %635 = vmatprep.subr.mxu0 0.0
    %636 = vmatpush2.msra.mxu0 %v520
    %637 = vmatprep.subr.mxu0 0.0
    %638 = vmatpush2.msra.mxu0 %v519
    %639 = vmatprep.subr.mxu0 0.0
    %640 = vmatpush2.msra.mxu0 %v518
    %641 = vmatprep.subr.mxu0 0.0
    %642 = vmatpush2.msra.mxu0 %v517
    %643 = vmatprep.subr.mxu0 0.0
    %644 = vmatpush2.msra.mxu0 %v516
    %645 = vmatprep.subr.mxu0 0.0
    %646 = vmatpush2.msra.mxu0 %v515
    %647 = vmatprep.subr.mxu0 0.0
    %648 = vmatpush2.msra.mxu0 %v514
    %649 = vmatprep.mubr.f32.mxu0 %v494
    %650 = vmatmul.mubr.f32.gmra.mxu0 %v493
    %v651 = vpop.f32.mrf.mxu0
    %v652 = vadd.f32 %v583, %v651
    %v653 = vpop.f32.mrf.mxu0
    %654 = vdwg.mxu0
    %655 = vmatprep.subr.mxu0 0.0
    %656 = vmatpush1.msra.mxu0 %v545
    %657 = vmatprep.subr.mxu0 0.0
    %658 = vmatpush1.msra.mxu0 %v544
    %659 = vmatprep.subr.mxu0 0.0
    %660 = vmatpush1.msra.mxu0 %v543
    %661 = vmatprep.subr.mxu0 0.0
    %662 = vmatpush1.msra.mxu0 %v542
    %663 = vmatprep.subr.mxu0 0.0
    %664 = vmatpush1.msra.mxu0 %v541
    %665 = vmatprep.subr.mxu0 0.0
    %666 = vmatpush1.msra.mxu0 %v540
    %667 = vmatprep.subr.mxu0 0.0
    %668 = vmatpush1.msra.mxu0 %v539
    %669 = vmatprep.subr.mxu0 0.0
    %670 = vmatpush1.msra.mxu0 %v538
    %671 = vmatprep.subr.mxu0 0.0
    %672 = vmatpush1.msra.mxu0 %v537
    %673 = vmatprep.subr.mxu0 0.0
    %674 = vmatpush1.msra.mxu0 %v536
    %675 = vmatprep.subr.mxu0 0.0
    %676 = vmatpush1.msra.mxu0 %v535
    %677 = vmatprep.subr.mxu0 0.0
    %678 = vmatpush1.msra.mxu0 %v534
    %679 = vmatprep.subr.mxu0 0.0
    %680 = vmatpush1.msra.mxu0 %v533
    %681 = vmatprep.subr.mxu0 0.0
    %682 = vmatpush1.msra.mxu0 %v532
    %683 = vmatprep.subr.mxu0 0.0
    %684 = vmatpush1.msra.mxu0 %v531
    %685 = vmatprep.subr.mxu0 0.0
    %686 = vmatpush1.msra.mxu0 %v530
    %687 = vmatprep.subr.mxu0 0.0
    %688 = vmatpush2.msra.mxu0 %v561
    %689 = vmatprep.subr.mxu0 0.0
    %690 = vmatpush2.msra.mxu0 %v560
    %691 = vmatprep.subr.mxu0 0.0
    %692 = vmatpush2.msra.mxu0 %v559
    %693 = vmatprep.subr.mxu0 0.0
    %694 = vmatpush2.msra.mxu0 %v558
    %695 = vmatprep.subr.mxu0 0.0
    %696 = vmatpush2.msra.mxu0 %v557
    %697 = vmatprep.subr.mxu0 0.0
    %698 = vmatpush2.msra.mxu0 %v556
    %699 = vmatprep.subr.mxu0 0.0
    %700 = vmatpush2.msra.mxu0 %v555
    %701 = vmatprep.subr.mxu0 0.0
    %702 = vmatpush2.msra.mxu0 %v554
    %703 = vmatprep.subr.mxu0 0.0
    %704 = vmatpush2.msra.mxu0 %v553
    %705 = vmatprep.subr.mxu0 0.0
    %706 = vmatpush2.msra.mxu0 %v552
    %707 = vmatprep.subr.mxu0 0.0
    %708 = vmatpush2.msra.mxu0 %v551
    %709 = vmatprep.subr.mxu0 0.0
    %710 = vmatpush2.msra.mxu0 %v550
    %711 = vmatprep.subr.mxu0 0.0
    %712 = vmatpush2.msra.mxu0 %v549
    %713 = vmatprep.subr.mxu0 0.0
    %714 = vmatpush2.msra.mxu0 %v548
    %715 = vmatprep.subr.mxu0 0.0
    %716 = vmatpush2.msra.mxu0 %v547
    %717 = vmatprep.subr.mxu0 0.0
    %718 = vmatpush2.msra.mxu0 %v546
    %719 = vmatprep.mubr.f32.mxu0 %v496
    %720 = vmatmul.mubr.f32.gmra.mxu0 %v495
    %v721 = vpop.f32.mrf.mxu0
    %v722 = vadd.f32 %v652, %v721
    %v723 = vpop.f32.mrf.mxu0
    %724 = vdwg.mxu0
    %725 = vmatprep.subr.mxu0 0.0
    %726 = vmatpush1.msra.mxu0 %v577
    %727 = vmatprep.subr.mxu0 0.0
    %728 = vmatpush1.msra.mxu0 %v576
    %729 = vmatprep.subr.mxu0 0.0
    %730 = vmatpush1.msra.mxu0 %v575
    %731 = vmatprep.subr.mxu0 0.0
    %732 = vmatpush1.msra.mxu0 %v574
    %733 = vmatprep.subr.mxu0 0.0
    %734 = vmatpush1.msra.mxu0 %v573
    %735 = vmatprep.subr.mxu0 0.0
    %736 = vmatpush1.msra.mxu0 %v572
    %737 = vmatprep.subr.mxu0 0.0
    %738 = vmatpush1.msra.mxu0 %v571
    %739 = vmatprep.subr.mxu0 0.0
    %740 = vmatpush1.msra.mxu0 %v570
    %741 = vmatprep.subr.mxu0 0.0
    %742 = vmatpush1.msra.mxu0 %v569
    %743 = vmatprep.subr.mxu0 0.0
    %744 = vmatpush1.msra.mxu0 %v568
    %745 = vmatprep.subr.mxu0 0.0
    %746 = vmatpush1.msra.mxu0 %v567
    %747 = vmatprep.subr.mxu0 0.0
    %748 = vmatpush1.msra.mxu0 %v566
    %749 = vmatprep.subr.mxu0 0.0
    %750 = vmatpush1.msra.mxu0 %v565
    %751 = vmatprep.subr.mxu0 0.0
    %752 = vmatpush1.msra.mxu0 %v564
    %753 = vmatprep.subr.mxu0 0.0
    %754 = vmatpush1.msra.mxu0 %v563
    %755 = vmatprep.subr.mxu0 0.0
    %756 = vmatpush1.msra.mxu0 %v562
    %757 = vmatprep.subr.mxu0 0.0
    %758 = vmatpush2.msra.mxu0 0.0
    %759 = vmatprep.subr.mxu0 0.0
    %760 = vmatpush2.msra.mxu0 0.0
    %761 = vmatprep.subr.mxu0 0.0
    %762 = vmatpush2.msra.mxu0 0.0
    %763 = vmatprep.subr.mxu0 0.0
    %764 = vmatpush2.msra.mxu0 0.0
    %765 = vmatprep.subr.mxu0 0.0
    %766 = vmatpush2.msra.mxu0 0.0
    %767 = vmatprep.subr.mxu0 0.0
    %768 = vmatpush2.msra.mxu0 0.0
    %769 = vmatprep.subr.mxu0 0.0
    %770 = vmatpush2.msra.mxu0 0.0
    %771 = vmatprep.subr.mxu0 0.0
    %772 = vmatpush2.msra.mxu0 0.0
    %773 = vmatprep.subr.mxu0 0.0
    %774 = vmatpush2.msra.mxu0 0.0
    %775 = vmatprep.subr.mxu0 0.0
    %776 = vmatpush2.msra.mxu0 0.0
    %777 = vmatprep.subr.mxu0 0.0
    %778 = vmatpush2.msra.mxu0 0.0
    %779 = vmatprep.subr.mxu0 0.0
    %780 = vmatpush2.msra.mxu0 0.0
    %781 = vmatprep.subr.mxu0 0.0
    %782 = vmatpush2.msra.mxu0 0.0
    %783 = vmatprep.subr.mxu0 0.0
    %784 = vmatpush2.msra.mxu0 0.0
    %785 = vmatprep.subr.mxu0 0.0
    %786 = vmatpush2.msra.mxu0 0.0
    %787 = vmatprep.subr.mxu0 0.0
    %788 = vmatpush2.msra.mxu0 0.0
    %789 = vmatprep.mubr.f32.mxu0 0.0
    %790 = vmatmul.mubr.f32.gmra.mxu0 %v497
    %v791 = vpop.f32.mrf.mxu0
    %v792 = vadd.f32 %v722, %v791
    %v793 = vpop.f32.mrf.mxu0
    %794 = vdwg.mxu0
    %vm795 = vcmask 261120
    %796 = vst.msk [vmem:[#allocation2] sm:$0xff] %vm795, %v792
    // Predicated region
    $region22: #{tpu_custom_call.1} parent=1 // pred_check
      _
    $region23: #{tpu_custom_call.1} parent=1 // pred_check_branch
      %798 = sbr.rel (0) target = $region25
    $region24: #{tpu_custom_call.1} parent=1 // pred_region
      %s800 = ssub.s32 128, 128
      %801 = vsyncadd [#allocation3], %s800
      %s803 = sshll.u32 [#allocation2], 4
      %s804 = int_to_ptr.vmem [resolvable:$true] %s803
      %806 = dma.vmem_to_hbm [thread:$0]  %s804, 128, %s5, [#allocation3]
    $region25: #{tpu_custom_call.1} parent=1 // pred_fallthru
      _
    // Predicated region
    $region26: #{tpu_custom_call.1} parent=1 // pred_check
      _
    $region27: #{tpu_custom_call.1} parent=1 // pred_check_branch
      %808 = sbr.rel (0) target = $region29
    $region28: #{tpu_custom_call.1} parent=1 // pred_region
      %809 = dma.done [#allocation3], 128
    $region29: #{tpu_custom_call.1} parent=1 // pred_fallthru
      _
    %810 = vsyncpa [#allocation3], 1

</llo_original>
